<compile_context>
chip_gen: v6e
topology: v6e:2x2x1
jax: 0.10.0
libtpu: 0.0.40
codegen_flags: <defaults>
</compile_context>

<pallas_src>
import jax
import jax.numpy as jnp
from jax.experimental import pallas as pl
from jax.experimental.pallas import tpu as pltpu


def _flash_attention_kernel(q_ref, k_ref, v_ref, m_ref, o_ref,
                            m_sc, l_sc, acc_sc):
    """One (hb, tq, tk) tile of online-softmax attention.

    q_ref:   (hb, tq, D)   bfloat16  (pre-scaled by 1/sqrt(Sq) in the wrapper)
    k_ref:   (hb, tk, D)   bfloat16
    v_ref:   (hb, tk, Dv)  bfloat16
    m_ref:   (hb, tq, tk)  original mask dtype (0 = masked out, nonzero = keep)
    o_ref:   (hb, tq, Dv)  float32
    m_sc/l_sc: (hb, tq, 1)  float32 running max / denom
    acc_sc:    (hb, tq, Dv) float32 running numerator
    """
    kv = pl.program_id(2)

    @pl.when(kv == 0)
    def _init():
        m_sc[...] = jnp.full_like(m_sc, -jnp.inf)
        l_sc[...] = jnp.zeros_like(l_sc)
        acc_sc[...] = jnp.zeros_like(acc_sc)

    # score tile: batched q.k^T contraction over the last dims (no explicit k.T).
    # bf16 MXU inputs, f32 accumulation.  No per-step casts or scaling: q/k/v arrive
    # in bf16 and q is already pre-scaled.
    s = jnp.einsum("bqd,bkd->bqk", q_ref[...], k_ref[...],
                   preferred_element_type=jnp.float32)    # (hb, tq, tk) f32

    # masked_fill(mask == 0, finfo(float32).min) — keep finite (see header note).
    s = jnp.where(m_ref[...] == 0, jnp.finfo(jnp.float32).min, s)

    # Online softmax update.
    m_prev = m_sc[...]
    m_new = jnp.maximum(m_prev, jnp.max(s, axis=-1, keepdims=True))
    alpha = jnp.exp(m_prev - m_new)
    p = jnp.exp(s - m_new)

    l_sc[...] = alpha * l_sc[...] + jnp.sum(p, axis=-1, keepdims=True)
    acc_sc[...] = alpha * acc_sc[...] + jnp.einsum(
        "bqk,bkd->bqd", p.astype(jnp.bfloat16), v_ref[...],
        preferred_element_type=jnp.float32)
    m_sc[...] = m_new

    @pl.when(kv == pl.num_programs(2) - 1)
    def _finalize():
        inv_l = pl.reciprocal(l_sc[...], approx=True)     # EUP slot, once per tile
        o_ref[...] = (acc_sc[...] * inv_l).astype(o_ref.dtype)


def _pick_tile(n, preferred):
    """Largest preferred tile that evenly divides n; fall back to full extent."""
    for p in preferred:
        if p <= n and n % p == 0:
            return p
    return n


def _pick_head_batch(BH, sq_tiles, tq, tk):
    """Batch heads per grid step for tiny per-head tiles, but never collapse the
    parallel grid axes to a single step (v7x shards them across 2 TensorCores)."""
    if tq * tk > 128 * 128:
        return 1
    for c in (16, 8, 4, 2):
        if c <= BH and BH % c == 0 and (BH // c) * sq_tiles >= 2:
            return c
    return 1


def scaled_dot_product_attention(q, k, v, mask):
    """q: (B,H,Sq,D), k: (B,H,Sk,D), v: (B,H,Sk,Dv), mask: (B,H,Sq,Sk) -> (B,H,Sq,Dv)."""
    B, H, Sq, D = q.shape
    Sk = k.shape[2]
    Dv = v.shape[3]
    BH = B * H

    # torch divides by q.shape[-2] ** 0.5 == sqrt(Sq), the FULL query length; compute
    # it here, never from a tiled block shape.
    scale = 1.0 / (float(Sq) ** 0.5)

    # Single fused wrapper pass per tensor: (scale for q) + bf16 cast + reshape.
    # The scale fuses into the bf16 cast that is needed anyway, so it costs no extra
    # HBM pass, and the kernel sees pre-scaled bf16 q (no per-kv-step VALU work).
    qf = (q.reshape(BH, Sq, D) * scale).astype(jnp.bfloat16)
    kf = k.reshape(BH, Sk, D).astype(jnp.bfloat16)
    vf = v.reshape(BH, Sk, Dv).astype(jnp.bfloat16)
    # Mask streamed as-is (reshape is metadata-only); ==0 compare happens in-kernel.
    mf = mask.reshape(BH, Sq, Sk)

    # Flash tiles for long sequences, full extents for short ones.
    tq = _pick_tile(Sq, (512, 256, 128))
    tk = _pick_tile(Sk, (1024, 512, 256, 128))
    sq_tiles = Sq // tq
    sk_tiles = Sk // tk
    hb = _pick_head_batch(BH, sq_tiles, tq, tk)

    grid = (BH // hb, sq_tiles, sk_tiles)

    out = pl.pallas_call(
        _flash_attention_kernel,
        out_shape=jax.ShapeDtypeStruct((BH, Sq, Dv), q.dtype),
        grid_spec=pltpu.PrefetchScalarGridSpec(
            num_scalar_prefetch=0,
            grid=grid,
            in_specs=[
                pl.BlockSpec((hb, tq, D), lambda b, i, j: (b, i, 0)),
                pl.BlockSpec((hb, tk, D), lambda b, i, j: (b, j, 0)),
                pl.BlockSpec((hb, tk, Dv), lambda b, i, j: (b, j, 0)),
                pl.BlockSpec((hb, tq, tk), lambda b, i, j: (b, i, j)),
            ],
            out_specs=pl.BlockSpec((hb, tq, Dv), lambda b, i, j: (b, i, 0)),
            scratch_shapes=[
                pltpu.VMEM((hb, tq, 1), jnp.float32),    # running max
                pltpu.VMEM((hb, tq, 1), jnp.float32),    # running denom
                pltpu.VMEM((hb, tq, Dv), jnp.float32),   # running numerator
            ],
        ),
        compiler_params=pltpu.CompilerParams(
            dimension_semantics=("parallel", "parallel", "arbitrary"),
        ),
    )(qf, kf, vf, mf)

    return out.reshape(B, H, Sq, Dv)


def _reference(q, k, v, mask):
    sq = q.shape[-2]
    score = jnp.einsum("bhqd,bhkd->bhqk", q, k) / (float(sq) ** 0.5)
    score = jnp.where(mask == 0, jnp.finfo(jnp.float32).min, score)
    p = jax.nn.softmax(score, axis=-1)
    return jnp.einsum("bhqk,bhkd->bhqd", p, v)


if __name__ == "__main__":
    key = jax.random.PRNGKey(0)
    kq, kk, kv, km = jax.random.split(key, 4)

    B, H, Sq, Sk, D = 2, 2, 8, 8, 32

    q = jax.random.normal(kq, (B, H, Sq, D), dtype=jnp.float32)
    k = jax.random.normal(kk, (B, H, Sk, D), dtype=jnp.float32)
    v = jax.random.normal(kv, (B, H, Sk, D), dtype=jnp.float32)
    # binary mask, 0 = masked, 1 = keep (ensure no row is fully masked)
    mask = (jax.random.uniform(km, (B, H, Sq, Sk)) > 0.3).astype(jnp.float32)
    mask = mask.at[..., 0].set(1.0)

    out = scaled_dot_product_attention(q, k, v, mask)
    out = jax.block_until_ready(out)

    ref = _reference(q, k, v, mask)
    assert out.shape == (B, H, Sq, D)
    # bf16 MXU inputs (f32 accumulation) + approx reciprocal -> loosened tolerance.
    assert jnp.allclose(out, ref, atol=5e-2, rtol=5e-2), "mismatch vs reference"

    print("KERNEL_OK")
</pallas_src>

<mosaic_0001>
module attributes {stable_mosaic.version = 11 : i64} {
  func.func @_flash_attention_kernel(%arg0: i32, %arg1: i32, %arg2: i32, %arg3: memref<2x8x32xbf16, #tpu.memory_space<vmem>>, %arg4: memref<2x8x32xbf16, #tpu.memory_space<vmem>>, %arg5: memref<2x8x32xbf16, #tpu.memory_space<vmem>>, %arg6: memref<2x8x8xf32, #tpu.memory_space<vmem>>, %arg7: memref<2x8x32xf32, #tpu.memory_space<vmem>>, %arg8: memref<2x8x1xf32, #tpu.memory_space<vmem>>, %arg9: memref<2x8x1xf32, #tpu.memory_space<vmem>>, %arg10: memref<2x8x32xf32, #tpu.memory_space<vmem>>) attributes {dimension_semantics = [#tpu.dimension_semantics<parallel>, #tpu.dimension_semantics<parallel>, #tpu.dimension_semantics<arbitrary>], iteration_bounds = array<i64: 2, 1, 1>, scalar_prefetch = 0 : i64, scratch_operands = 3 : i64, tpu.core_type = #tpu.core_type<tc>, window_params = [{transform_indices = @transform_0, window_bounds = array<i64: 2, 8, 32>}, {transform_indices = @transform_1, window_bounds = array<i64: 2, 8, 32>}, {transform_indices = @transform_2, window_bounds = array<i64: 2, 8, 32>}, {transform_indices = @transform_3, window_bounds = array<i64: 2, 8, 8>}, {transform_indices = @transform_4, window_bounds = array<i64: 2, 8, 32>}]} {
    %c0_i32 = arith.constant 0 : i32
    %0 = arith.cmpi eq, %arg2, %c0_i32 : i32
    %1 = arith.extui %0 : i1 to i32
    %c0_i32_0 = arith.constant 0 : i32
    %2 = arith.cmpi ne, %1, %c0_i32_0 : i32
    scf.if %2 {
      %cst_37 = arith.constant 0xFF800000 : f32
      %38 = vector.broadcast %cst_37 : f32 to vector<2x8x1xf32>
      %c0_38 = arith.constant 0 : index
      %c0_39 = arith.constant 0 : index
      %c0_40 = arith.constant 0 : index
      %39 = vector.load %arg8[%c0_38, %c0_39, %c0_40] : memref<2x8x1xf32, #tpu.memory_space<vmem>>, vector<2x8x1xf32>
      tpu.vector_store %arg8[%c0_38, %c0_39, %c0_40], %38 {strides = array<i32>} : memref<2x8x1xf32, #tpu.memory_space<vmem>>, vector<2x8x1xf32>,
      %cst_41 = arith.constant 0.000000e+00 : f32
      %40 = vector.broadcast %cst_41 : f32 to vector<2x8x1xf32>
      %c0_42 = arith.constant 0 : index
      %c0_43 = arith.constant 0 : index
      %c0_44 = arith.constant 0 : index
      %41 = vector.load %arg9[%c0_42, %c0_43, %c0_44] : memref<2x8x1xf32, #tpu.memory_space<vmem>>, vector<2x8x1xf32>
      tpu.vector_store %arg9[%c0_42, %c0_43, %c0_44], %40 {strides = array<i32>} : memref<2x8x1xf32, #tpu.memory_space<vmem>>, vector<2x8x1xf32>,
      %cst_45 = arith.constant 0.000000e+00 : f32
      %42 = vector.broadcast %cst_45 : f32 to vector<2x8x32xf32>
      %c0_46 = arith.constant 0 : index
      %c0_47 = arith.constant 0 : index
      %c0_48 = arith.constant 0 : index
      %43 = vector.load %arg10[%c0_46, %c0_47, %c0_48] : memref<2x8x32xf32, #tpu.memory_space<vmem>>, vector<2x8x32xf32>
      tpu.vector_store %arg10[%c0_46, %c0_47, %c0_48], %42 {strides = array<i32>} : memref<2x8x32xf32, #tpu.memory_space<vmem>>, vector<2x8x32xf32>,
    } else {
    }
    %c0 = arith.constant 0 : index
    %c0_1 = arith.constant 0 : index
    %c0_2 = arith.constant 0 : index
    %3 = vector.load %arg3[%c0, %c0_1, %c0_2] : memref<2x8x32xbf16, #tpu.memory_space<vmem>>, vector<2x8x32xbf16>
    %c0_3 = arith.constant 0 : index
    %c0_4 = arith.constant 0 : index
    %c0_5 = arith.constant 0 : index
    %4 = vector.load %arg4[%c0_3, %c0_4, %c0_5] : memref<2x8x32xbf16, #tpu.memory_space<vmem>>, vector<2x8x32xbf16>
    "tpu.trace_start"() <{level = 10 : i32, message = "bqd,bkd->bqk"}> : () -> ()
    %cst = arith.constant dense<0.000000e+00> : vector<2x8x8xf32>
    %5 = tpu.matmul %3, %4, %cst {dimension_numbers = #tpu.dot_dimension_numbers<[2], [2], [1], [1], [0, 0, 0, 1, 1, 1], [0], [0]>} : vector<2x8x32xbf16>, vector<2x8x32xbf16>, vector<2x8x8xf32> -> vector<2x8x8xf32>
    "tpu.trace_stop"() : () -> ()
    %c0_6 = arith.constant 0 : index
    %c0_7 = arith.constant 0 : index
    %c0_8 = arith.constant 0 : index
    %6 = vector.load %arg6[%c0_6, %c0_7, %c0_8] : memref<2x8x8xf32, #tpu.memory_space<vmem>>, vector<2x8x8xf32>
    %cst_9 = arith.constant 0.000000e+00 : f32
    %7 = vector.broadcast %cst_9 : f32 to vector<2x8x8xf32>
    %8 = arith.cmpf oeq, %6, %7 : vector<2x8x8xf32>
    %cst_10 = arith.constant -3.40282347E+38 : f32
    %9 = vector.broadcast %cst_10 : f32 to vector<2x8x8xf32>
    %10 = arith.select %8, %9, %5 : vector<2x8x8xi1>, vector<2x8x8xf32>
    %c0_11 = arith.constant 0 : index
    %c0_12 = arith.constant 0 : index
    %c0_13 = arith.constant 0 : index
    %11 = vector.load %arg8[%c0_11, %c0_12, %c0_13] : memref<2x8x1xf32, #tpu.memory_space<vmem>>, vector<2x8x1xf32>
    %cst_14 = arith.constant dense<0xFF800000> : vector<2x8xf32>
    %12 = vector.multi_reduction <maximumf>, %10, %cst_14 [2] : vector<2x8x8xf32> to vector<2x8xf32>
    %13 = vector.shape_cast %12 : vector<2x8xf32> to vector<2x8x1xf32>
    %14 = arith.maximumf %11, %13 : vector<2x8x1xf32>
    %15 = arith.subf %11, %14 : vector<2x8x1xf32>
    %16 = math.exp %15 : vector<2x8x1xf32>
    %17 = vector.broadcast %14 : vector<2x8x1xf32> to vector<2x8x8xf32>
    %18 = arith.subf %10, %17 : vector<2x8x8xf32>
    %19 = math.exp %18 : vector<2x8x8xf32>
    %c0_15 = arith.constant 0 : index
    %c0_16 = arith.constant 0 : index
    %c0_17 = arith.constant 0 : index
    %20 = vector.load %arg9[%c0_15, %c0_16, %c0_17] : memref<2x8x1xf32, #tpu.memory_space<vmem>>, vector<2x8x1xf32>
    %21 = arith.mulf %16, %20 : vector<2x8x1xf32>
    %cst_18 = arith.constant dense<0.000000e+00> : vector<2x8xf32>
    %22 = vector.multi_reduction <add>, %19, %cst_18 [2] : vector<2x8x8xf32> to vector<2x8xf32>
    %23 = vector.shape_cast %22 : vector<2x8xf32> to vector<2x8x1xf32>
    %24 = arith.addf %21, %23 : vector<2x8x1xf32>
    %c0_19 = arith.constant 0 : index
    %c0_20 = arith.constant 0 : index
    %c0_21 = arith.constant 0 : index
    %25 = vector.load %arg9[%c0_19, %c0_20, %c0_21] : memref<2x8x1xf32, #tpu.memory_space<vmem>>, vector<2x8x1xf32>
    tpu.vector_store %arg9[%c0_19, %c0_20, %c0_21], %24 {strides = array<i32>} : memref<2x8x1xf32, #tpu.memory_space<vmem>>, vector<2x8x1xf32>,
    %c0_22 = arith.constant 0 : index
    %c0_23 = arith.constant 0 : index
    %c0_24 = arith.constant 0 : index
    %26 = vector.load %arg10[%c0_22, %c0_23, %c0_24] : memref<2x8x32xf32, #tpu.memory_space<vmem>>, vector<2x8x32xf32>
    %27 = vector.broadcast %16 : vector<2x8x1xf32> to vector<2x8x32xf32>
    %28 = arith.mulf %27, %26 : vector<2x8x32xf32>
    %29 = arith.truncf %19 : vector<2x8x8xf32> to vector<2x8x8xbf16>
    %c0_25 = arith.constant 0 : index
    %c0_26 = arith.constant 0 : index
    %c0_27 = arith.constant 0 : index
    %30 = vector.load %arg5[%c0_25, %c0_26, %c0_27] : memref<2x8x32xbf16, #tpu.memory_space<vmem>>, vector<2x8x32xbf16>
    "tpu.trace_start"() <{level = 10 : i32, message = "bqk,bkd->bqd"}> : () -> ()
    %cst_28 = arith.constant dense<0.000000e+00> : vector<2x8x32xf32>
    %31 = tpu.matmul %29, %30, %cst_28 {dimension_numbers = #tpu.dot_dimension_numbers<[2], [1], [1], [2], [0, 0, 0, 1, 1, 2], [0], [0]>} : vector<2x8x8xbf16>, vector<2x8x32xbf16>, vector<2x8x32xf32> -> vector<2x8x32xf32>
    "tpu.trace_stop"() : () -> ()
    %32 = arith.addf %28, %31 : vector<2x8x32xf32>
    %c0_29 = arith.constant 0 : index
    %c0_30 = arith.constant 0 : index
    %c0_31 = arith.constant 0 : index
    %33 = vector.load %arg10[%c0_29, %c0_30, %c0_31] : memref<2x8x32xf32, #tpu.memory_space<vmem>>, vector<2x8x32xf32>
    tpu.vector_store %arg10[%c0_29, %c0_30, %c0_31], %32 {strides = array<i32>} : memref<2x8x32xf32, #tpu.memory_space<vmem>>, vector<2x8x32xf32>,
    %c0_32 = arith.constant 0 : index
    %c0_33 = arith.constant 0 : index
    %c0_34 = arith.constant 0 : index
    %34 = vector.load %arg8[%c0_32, %c0_33, %c0_34] : memref<2x8x1xf32, #tpu.memory_space<vmem>>, vector<2x8x1xf32>
    tpu.vector_store %arg8[%c0_32, %c0_33, %c0_34], %14 {strides = array<i32>} : memref<2x8x1xf32, #tpu.memory_space<vmem>>, vector<2x8x1xf32>,
    %c0_i32_35 = arith.constant 0 : i32
    %35 = arith.cmpi eq, %arg2, %c0_i32_35 : i32
    %36 = arith.extui %35 : i1 to i32
    %c0_i32_36 = arith.constant 0 : i32
    %37 = arith.cmpi ne, %36, %c0_i32_36 : i32
    scf.if %37 {
      %c0_37 = arith.constant 0 : index
      %c0_38 = arith.constant 0 : index
      %c0_39 = arith.constant 0 : index
      %38 = vector.load %arg9[%c0_37, %c0_38, %c0_39] : memref<2x8x1xf32, #tpu.memory_space<vmem>>, vector<2x8x1xf32>
      %39 = tpu.reciprocal %38 {approx = true} : vector<2x8x1xf32> -> vector<2x8x1xf32>
      %c0_40 = arith.constant 0 : index
      %c0_41 = arith.constant 0 : index
      %c0_42 = arith.constant 0 : index
      %40 = vector.load %arg10[%c0_40, %c0_41, %c0_42] : memref<2x8x32xf32, #tpu.memory_space<vmem>>, vector<2x8x32xf32>
      %41 = vector.broadcast %39 : vector<2x8x1xf32> to vector<2x8x32xf32>
      %42 = arith.mulf %40, %41 : vector<2x8x32xf32>
      %c0_43 = arith.constant 0 : index
      %c0_44 = arith.constant 0 : index
      %c0_45 = arith.constant 0 : index
      %43 = vector.load %arg7[%c0_43, %c0_44, %c0_45] : memref<2x8x32xf32, #tpu.memory_space<vmem>>, vector<2x8x32xf32>
      tpu.vector_store %arg7[%c0_43, %c0_44, %c0_45], %42 {strides = array<i32>} : memref<2x8x32xf32, #tpu.memory_space<vmem>>, vector<2x8x32xf32>,
    } else {
    }
    return
  }
  func.func @transform_0(%arg0: i32, %arg1: i32, %arg2: i32) -> (i32, i32, i32) {
    %c0_i32 = arith.constant 0 : i32
    %c0_i32_0 = arith.constant 0 : i32
    return %arg0, %arg1, %c0_i32 : i32, i32, i32
  }
  func.func @transform_1(%arg0: i32, %arg1: i32, %arg2: i32) -> (i32, i32, i32) {
    %c0_i32 = arith.constant 0 : i32
    %c0_i32_0 = arith.constant 0 : i32
    return %arg0, %arg2, %c0_i32 : i32, i32, i32
  }
  func.func @transform_2(%arg0: i32, %arg1: i32, %arg2: i32) -> (i32, i32, i32) {
    %c0_i32 = arith.constant 0 : i32
    %c0_i32_0 = arith.constant 0 : i32
    return %arg0, %arg2, %c0_i32 : i32, i32, i32
  }
  func.func @transform_3(%arg0: i32, %arg1: i32, %arg2: i32) -> (i32, i32, i32) {
    %c0_i32 = arith.constant 0 : i32
    return %arg0, %arg1, %arg2 : i32, i32, i32
  }
  func.func @transform_4(%arg0: i32, %arg1: i32, %arg2: i32) -> (i32, i32, i32) {
    %c0_i32 = arith.constant 0 : i32
    %c0_i32_0 = arith.constant 0 : i32
    return %arg0, %arg1, %c0_i32 : i32, i32, i32
  }
}

</mosaic_0001>

<llo_original>
// kernel: tpu_custom_call.1
$region0: #{tpu_custom_call.1}
  #allocation0 [shape = 'u32[]', space=smem, size = 0x4, offset = 0x4, fixed_abs, tag = 'smem constant byte address 0x4 - core index']
  #allocation1 [shape = 'u32[144,128]{1,0:T(1,128)}', space=vmem, size = 0x12000, scoped, tag = 'internal scratch']
  #allocation2 [shape = 'f32[2,8,1]{2,1,0:T(8,128)}', space=vmem, size = 0x2000, scoped, tag = 'scratch operand']
  #allocation3 [shape = 'f32[2,8,1]{2,1,0:T(8,128)}', space=vmem, size = 0x2000, scoped, tag = 'scratch operand']
  #allocation4 [shape = 'f32[2,8,32]{2,1,0:T(8,128)}', space=vmem, size = 0x2000, scoped, tag = 'scratch operand']
  %s0 = inlined_call_operand.hbm [shape: bf16[4,8,32], index: 0, kind: input, shape index: {}]
  %s1 = inlined_call_operand.hbm [shape: bf16[4,8,32], index: 1, kind: input, shape index: {}]
  %s2 = inlined_call_operand.hbm [shape: bf16[4,8,32], index: 2, kind: input, shape index: {}]
  %s3 = inlined_call_operand.hbm [shape: f32[4,8,8], index: 3, kind: input, shape index: {}]
  %s4 = inlined_call_operand.hbm [shape: f32[4,8,32], index: 4, kind: output, shape index: {}]
  %s5 = sld [smem:[#allocation0]]
  $region73: #{tpu_custom_call.1} parent=0
    _
  %s7 = ssub.s32 1, %s5
  %s8 = scalar_select 0, %s7, %s5
  $region1: #{tpu_custom_call.1} parent=0
    #allocation5 [shape = 'u8[8192]{0}', space=vmem, size = 0x2000, scoped, tag = 'input window, operand 0']
    #allocation6 [shape = 's32[2]{0}', space=sflag, size = 0x8, scoped, tag = 'scoped memory for tpu_custom_call.1']
    #allocation7 [shape = 's32[2]{0}', space=sflag, size = 0x8, scoped, tag = 'scoped memory for tpu_custom_call.1']
    #allocation8 [shape = 'u8[8192]{0}', space=vmem, size = 0x2000, scoped, tag = 'input window, operand 1']
    #allocation9 [shape = 's32[2]{0}', space=sflag, size = 0x8, scoped, tag = 'scoped memory for tpu_custom_call.1']
    #allocation10 [shape = 'u8[8192]{0}', space=vmem, size = 0x2000, scoped, tag = 'input window, operand 2']
    #allocation11 [shape = 'u8[16384]{0}', space=vmem, size = 0x4000, scoped, tag = 'input window, operand 3']
    #allocation12 [shape = 's32[2]{0}', space=sflag, size = 0x8, scoped, tag = 'scoped memory for tpu_custom_call.1']
    #allocation13 [shape = 'u8[16384]{0}', space=vmem, size = 0x4000, scoped, tag = 'output window, operand 0']
    %9 = vsyncpa [#allocation6], 0
    %s10 = scalar_lea.sflag [#allocation6], 1
    %11 = vsyncpa %s10, 0
    %12 = vsyncpa [#allocation9], 0
    %s13 = scalar_lea.sflag [#allocation9], 1
    %14 = vsyncpa %s13, 0
    %15 = vsyncpa [#allocation12], 0
    %s16 = scalar_lea.sflag [#allocation12], 1
    %17 = vsyncpa %s16, 0
    %18 = vsyncpa [#allocation7], 0
    %s19 = scalar_lea.sflag [#allocation7], 1
    %20 = vsyncpa %s19, 0
    loop: start=0, step=1, limit=4
    $region2: #{tpu_custom_call.1} parent=1 // loop_pre_header
      _
    $region3: #{tpu_custom_call.1} parent=1 // loop_header
      %s22 = sphi 0, %s26
      %p23 = scmp.ge.s32.totalorder %s22, 4
      %s29 = sphi 0, %s48
      %s30 = sphi 0, %s44
      %s31 = sphi 0, %s40
      %s32 = sphi 0, %s29
      %s33 = sphi 0, %s30
      %s34 = sphi 0, %s31
      %s35 = sphi 0, %s32
      %s36 = sphi 0, %s33
      %s37 = sphi 0, %s34
      %s53 = sphi 0, %s55
      %s56 = sphi 0, %s53
      %s57 = sphi 0, %s56
      %s73 = sphi 0, %s57
      %s81 = sphi 0, %s83
      %s84 = sphi 0, %s81
      %s85 = sphi 0, %s84
      %s101 = sphi 0, %s85
      %s109 = sphi 0, %s111
      %s112 = sphi 0, %s109
      %s113 = sphi 0, %s112
      %s129 = sphi 0, %s113
      %s139 = sphi 0, %s141
      %s142 = sphi 0, %s139
      %s143 = sphi 0, %s142
      %s159 = sphi 0, %s143
      %s167 = sphi 0, %s169
      %s170 = sphi 0, %s167
      %s171 = sphi 0, %s170
      %s187 = sphi 0, %s171
    $region4: #{tpu_custom_call.1} parent=1 // loop_header_branch
      %25 = sbr.rel (%p23) target = $region8
    $region5: #{tpu_custom_call.1} parent=1 // loop_body
      %s27 = ssub.s32 %s22, 1
      %s28 = ssub.s32 %s22, 2
      %s38 = sadd.s32 1, %s31
      %p39 = scmp.ge.s32.totalorder %s38, 1
      %s40 = scalar_select %p39, 0, %s38
      %s41 = sadd.s32 1, %s30
      %s42 = scalar_select %p39, %s41, %s30
      %p43 = scmp.ge.s32.totalorder %s42, 1
      %s44 = scalar_select %p43, 0, %s42
      %s45 = sadd.s32 1, %s29
      %s46 = scalar_select %p43, %s45, %s29
      %p47 = scmp.ge.s32.totalorder %s46, 2
      %s48 = scalar_select %p47, 0, %s46
      %s49 = ssub.s32 %s29, %s48
      %s50 = ssub.s32 %s30, %s44
      %s51 = sor.u32 %s49, %s50
      %p52 = scmp.eq.s32.totalorder %s51, 0
      %s54 = sadd.s32 %s53, 1
      %s55 = scalar_select %p52, %s53, %s54
      %p58 = pneg %p52
      %p59 = scmp.eq.s32.totalorder %s22, 1
      %p60 = por %p58, %p59
      %p61 = scmp.ne.s32.totalorder %s53, %s56
      %p62 = scmp.eq.s32.totalorder %s22, 0
      %p63 = por %p61, %p62
      %p64 = scmp.ne.s32.totalorder %s53, %s56
      %p65 = scmp.eq.s32.totalorder %s27, 1
      %p66 = por %p64, %p65
      %p67 = scmp.ne.s32.totalorder %s56, %s57
      %p68 = scmp.eq.s32.totalorder %s27, 0
      %p69 = por %p67, %p68
      %p70 = scmp.ne.s32.totalorder %s56, %s57
      %p71 = scmp.eq.s32.totalorder %s28, 1
      %p72 = por %p70, %p71
      %p74 = scmp.ne.s32.totalorder %s57, %s73
      %p75 = scmp.eq.s32.totalorder %s28, 0
      %p76 = por %p74, %p75
      %s77 = ssub.s32 %s29, %s48
      %s78 = ssub.s32 %s31, %s40
      %s79 = sor.u32 %s77, %s78
      %p80 = scmp.eq.s32.totalorder %s79, 0
      %s82 = sadd.s32 %s81, 1
      %s83 = scalar_select %p80, %s81, %s82
      %p86 = pneg %p80
      %p87 = scmp.eq.s32.totalorder %s22, 1
      %p88 = por %p86, %p87
      %p89 = scmp.ne.s32.totalorder %s81, %s84
      %p90 = scmp.eq.s32.totalorder %s22, 0
      %p91 = por %p89, %p90
      %p92 = scmp.ne.s32.totalorder %s81, %s84
      %p93 = scmp.eq.s32.totalorder %s27, 1
      %p94 = por %p92, %p93
      %p95 = scmp.ne.s32.totalorder %s84, %s85
      %p96 = scmp.eq.s32.totalorder %s27, 0
      %p97 = por %p95, %p96
      %p98 = scmp.ne.s32.totalorder %s84, %s85
      %p99 = scmp.eq.s32.totalorder %s28, 1
      %p100 = por %p98, %p99
      %p102 = scmp.ne.s32.totalorder %s85, %s101
      %p103 = scmp.eq.s32.totalorder %s28, 0
      %p104 = por %p102, %p103
      %s105 = ssub.s32 %s29, %s48
      %s106 = ssub.s32 %s31, %s40
      %s107 = sor.u32 %s105, %s106
      %p108 = scmp.eq.s32.totalorder %s107, 0
      %s110 = sadd.s32 %s109, 1
      %s111 = scalar_select %p108, %s109, %s110
      %p114 = pneg %p108
      %p115 = scmp.eq.s32.totalorder %s22, 1
      %p116 = por %p114, %p115
      %p117 = scmp.ne.s32.totalorder %s109, %s112
      %p118 = scmp.eq.s32.totalorder %s22, 0
      %p119 = por %p117, %p118
      %p120 = scmp.ne.s32.totalorder %s109, %s112
      %p121 = scmp.eq.s32.totalorder %s27, 1
      %p122 = por %p120, %p121
      %p123 = scmp.ne.s32.totalorder %s112, %s113
      %p124 = scmp.eq.s32.totalorder %s27, 0
      %p125 = por %p123, %p124
      %p126 = scmp.ne.s32.totalorder %s112, %s113
      %p127 = scmp.eq.s32.totalorder %s28, 1
      %p128 = por %p126, %p127
      %p130 = scmp.ne.s32.totalorder %s113, %s129
      %p131 = scmp.eq.s32.totalorder %s28, 0
      %p132 = por %p130, %p131
      %s133 = ssub.s32 %s29, %s48
      %s134 = ssub.s32 %s30, %s44
      %s135 = sor.u32 %s133, %s134
      %s136 = ssub.s32 %s31, %s40
      %s137 = sor.u32 %s135, %s136
      %p138 = scmp.eq.s32.totalorder %s137, 0
      %s140 = sadd.s32 %s139, 1
      %s141 = scalar_select %p138, %s139, %s140
      %p144 = pneg %p138
      %p145 = scmp.eq.s32.totalorder %s22, 1
      %p146 = por %p144, %p145
      %p147 = scmp.ne.s32.totalorder %s139, %s142
      %p148 = scmp.eq.s32.totalorder %s22, 0
      %p149 = por %p147, %p148
      %p150 = scmp.ne.s32.totalorder %s139, %s142
      %p151 = scmp.eq.s32.totalorder %s27, 1
      %p152 = por %p150, %p151
      %p153 = scmp.ne.s32.totalorder %s142, %s143
      %p154 = scmp.eq.s32.totalorder %s27, 0
      %p155 = por %p153, %p154
      %p156 = scmp.ne.s32.totalorder %s142, %s143
      %p157 = scmp.eq.s32.totalorder %s28, 1
      %p158 = por %p156, %p157
      %p160 = scmp.ne.s32.totalorder %s143, %s159
      %p161 = scmp.eq.s32.totalorder %s28, 0
      %p162 = por %p160, %p161
      %s163 = ssub.s32 %s29, %s48
      %s164 = ssub.s32 %s30, %s44
      %s165 = sor.u32 %s163, %s164
      %p166 = scmp.eq.s32.totalorder %s165, 0
      %s168 = sadd.s32 %s167, 1
      %s169 = scalar_select %p166, %s167, %s168
      %p172 = pneg %p166
      %p173 = scmp.eq.s32.totalorder %s22, 1
      %p174 = por %p172, %p173
      %p175 = scmp.ne.s32.totalorder %s167, %s170
      %p176 = scmp.eq.s32.totalorder %s22, 0
      %p177 = por %p175, %p176
      %p178 = scmp.ne.s32.totalorder %s167, %s170
      %p179 = scmp.eq.s32.totalorder %s27, 1
      %p180 = por %p178, %p179
      %p181 = scmp.ne.s32.totalorder %s170, %s171
      %p182 = scmp.eq.s32.totalorder %s27, 0
      %p183 = por %p181, %p182
      %p184 = scmp.ne.s32.totalorder %s170, %s171
      %p185 = scmp.eq.s32.totalorder %s28, 1
      %p186 = por %p184, %p185
      %p188 = scmp.ne.s32.totalorder %s171, %s187
      %p189 = scmp.eq.s32.totalorder %s28, 0
      %p190 = por %p188, %p189
      %p191 = scmp.le.s32.totalorder 1, %s22
      %p192 = scmp.lt.s32.totalorder %s22, 3
      %p193 = pnand %p191, %p192
      %p194 = pneg %p193
      // Predicated region
      $region9: #{tpu_custom_call.1} parent=5 // pred_check
        _
      $region10: #{tpu_custom_call.1} parent=5 // pred_check_branch
        %196 = sbr.rel (%p193) target = $region12
      $region11: #{tpu_custom_call.1} parent=5 // pred_region
        %s197 = ssub.s32 %s22, 1
      $region12: #{tpu_custom_call.1} parent=5 // pred_fallthru
        _
      %p198 = scmp.lt.s32.totalorder %s22, 2
      // Predicated region
      $region13: #{tpu_custom_call.1} parent=5 // pred_check
        %p199 = pneg %p198
      $region14: #{tpu_custom_call.1} parent=5 // pred_check_branch
        %201 = sbr.rel (%p199) target = $region16
      $region15: #{tpu_custom_call.1} parent=5 // pred_region
        // Predicated region
        $region17: #{tpu_custom_call.1} parent=15 // pred_check
          %p202 = pneg %p63
        $region18: #{tpu_custom_call.1} parent=15 // pred_check_branch
          %204 = sbr.rel (%p202) target = $region20
        $region19: #{tpu_custom_call.1} parent=15 // pred_region
          %s205 = sand.u32 %s53, 1
          %s206 = scalar_lea.sflag [#allocation6], %s205
          %s207 = sand.u32 %s53, 1
          %s208 = smul.addr %s207, 8
          %s209 = scalar_lea.vmem [#allocation5], %s208
          %s210 = smul.u32 2, %s29
          %s212 = ssub.s32 128, 128
          %213 = vsyncadd %s206, %s212
          %s214 = sadd.s32 %s30, %s210
          %s215 = smul.addr %s214, 64
          %s216 = scalar_lea.hbm %s0, %s215
          %s217 = sshll.u32 %s209, 4
          %s218 = int_to_ptr.vmem [resolvable:$true] %s217
          %223 = dma.hbm_to_vmem [thread:$0]  %s216, 128, %s218, %s206, 64, 64, 4
        $region20: #{tpu_custom_call.1} parent=15 // pred_fallthru
          _
        // Predicated region
        $region21: #{tpu_custom_call.1} parent=15 // pred_check
          %p224 = pneg %p91
        $region22: #{tpu_custom_call.1} parent=15 // pred_check_branch
          %226 = sbr.rel (%p224) target = $region24
        $region23: #{tpu_custom_call.1} parent=15 // pred_region
          %s227 = sand.u32 %s22, 1
          %s228 = scalar_lea.sflag [#allocation9], %s227
          %s229 = sand.u32 %s81, 1
          %s230 = smul.addr %s229, 8
          %s231 = scalar_lea.vmem [#allocation8], %s230
          %s232 = smul.u32 2, %s29
          %s234 = ssub.s32 128, 128
          %235 = vsyncadd %s228, %s234
          %s236 = sadd.s32 %s31, %s232
          %s237 = smul.addr %s236, 64
          %s238 = scalar_lea.hbm %s1, %s237
          %s239 = sshll.u32 %s231, 4
          %s240 = int_to_ptr.vmem [resolvable:$true] %s239
          %245 = dma.hbm_to_vmem [thread:$0]  %s238, 128, %s240, %s228, 64, 64, 4
        $region24: #{tpu_custom_call.1} parent=15 // pred_fallthru
          _
        // Predicated region
        $region25: #{tpu_custom_call.1} parent=15 // pred_check
          %p246 = pneg %p119
        $region26: #{tpu_custom_call.1} parent=15 // pred_check_branch
          %248 = sbr.rel (%p246) target = $region28
        $region27: #{tpu_custom_call.1} parent=15 // pred_region
          %s249 = sand.u32 %s22, 1
          %s250 = scalar_lea.sflag [#allocation9], %s249
          %s251 = sand.u32 %s109, 1
          %s252 = smul.addr %s251, 8
          %s253 = scalar_lea.vmem [#allocation10], %s252
          %s254 = smul.u32 2, %s29
          %s256 = ssub.s32 128, 128
          %257 = vsyncadd %s250, %s256
          %s258 = sadd.s32 %s31, %s254
          %s259 = smul.addr %s258, 64
          %s260 = scalar_lea.hbm %s2, %s259
          %s261 = sshll.u32 %s253, 4
          %s262 = int_to_ptr.vmem [resolvable:$true] %s261
          %267 = dma.hbm_to_vmem [thread:$0]  %s260, 128, %s262, %s250, 64, 64, 4
        $region28: #{tpu_custom_call.1} parent=15 // pred_fallthru
          _
        // Predicated region
        $region29: #{tpu_custom_call.1} parent=15 // pred_check
          %p268 = pneg %p149
        $region30: #{tpu_custom_call.1} parent=15 // pred_check_branch
          %270 = sbr.rel (%p268) target = $region32
        $region31: #{tpu_custom_call.1} parent=15 // pred_region
          %s271 = sand.u32 %s139, 1
          %s272 = scalar_lea.sflag [#allocation12], %s271
          %s273 = sand.u32 %s139, 1
          %s274 = smul.addr %s273, 16
          %s275 = scalar_lea.vmem [#allocation11], %s274
          %s276 = smul.u32 2, %s29
          %s278 = ssub.s32 256, 256
          %279 = vsyncadd %s272, %s278
          %s280 = sadd.s32 %s31, %s30
          %s281 = sadd.s32 %s280, %s276
          %s282 = smul.addr %s281, 128
          %s283 = scalar_lea.hbm %s3, %s282
          %s284 = sshll.u32 %s275, 4
          %s285 = int_to_ptr.vmem [resolvable:$true] %s284
          %290 = dma.hbm_to_vmem [thread:$0]  %s283, 256, %s285, %s272, 128, 128, 8
        $region32: #{tpu_custom_call.1} parent=15 // pred_fallthru
          _
      $region16: #{tpu_custom_call.1} parent=5 // pred_fallthru
        _
      %p291 = scmp.le.s32.totalorder 1, %s22
      %p292 = scmp.lt.s32.totalorder %s22, 3
      %p293 = pnand %p291, %p292
      %p294 = pneg %p293
      // Predicated region
      $region33: #{tpu_custom_call.1} parent=5 // pred_check
        _
      $region34: #{tpu_custom_call.1} parent=5 // pred_check_branch
        %296 = sbr.rel (%p293) target = $region36
      $region35: #{tpu_custom_call.1} parent=5 // pred_region
        %s297 = ssub.s32 %s22, 1
        %s298 = sand.u32 %s56, 1
        %s299 = scalar_lea.sflag [#allocation6], %s298
        %s300 = sand.u32 %s56, 1
        %s301 = smul.addr %s300, 8
        %s302 = scalar_lea.vmem [#allocation5], %s301
        // Predicated region
        $region37: #{tpu_custom_call.1} parent=35 // pred_check
          %p303 = pneg %p69
        $region38: #{tpu_custom_call.1} parent=35 // pred_check_branch
          %305 = sbr.rel (%p303) target = $region40
        $region39: #{tpu_custom_call.1} parent=35 // pred_region
          %306 = dma.done %s299, 128
        $region40: #{tpu_custom_call.1} parent=35 // pred_fallthru
          _
        %s307 = sand.u32 %s27, 1
        %s308 = scalar_lea.sflag [#allocation9], %s307
        %s309 = sand.u32 %s84, 1
        %s310 = smul.addr %s309, 8
        %s311 = scalar_lea.vmem [#allocation8], %s310
        // Predicated region
        $region41: #{tpu_custom_call.1} parent=35 // pred_check
          %p312 = pneg %p97
        $region42: #{tpu_custom_call.1} parent=35 // pred_check_branch
          %314 = sbr.rel (%p312) target = $region44
        $region43: #{tpu_custom_call.1} parent=35 // pred_region
          %315 = dma.done %s308, 128
        $region44: #{tpu_custom_call.1} parent=35 // pred_fallthru
          _
        %s316 = sand.u32 %s27, 1
        %s317 = scalar_lea.sflag [#allocation9], %s316
        %s318 = sand.u32 %s112, 1
        %s319 = smul.addr %s318, 8
        %s320 = scalar_lea.vmem [#allocation10], %s319
        // Predicated region
        $region45: #{tpu_custom_call.1} parent=35 // pred_check
          %p321 = pneg %p125
        $region46: #{tpu_custom_call.1} parent=35 // pred_check_branch
          %323 = sbr.rel (%p321) target = $region48
        $region47: #{tpu_custom_call.1} parent=35 // pred_region
          %324 = dma.done %s317, 128
        $region48: #{tpu_custom_call.1} parent=35 // pred_fallthru
          _
        %s325 = sand.u32 %s142, 1
        %s326 = scalar_lea.sflag [#allocation12], %s325
        %s327 = sand.u32 %s142, 1
        %s328 = smul.addr %s327, 16
        %s329 = scalar_lea.vmem [#allocation11], %s328
        // Predicated region
        $region49: #{tpu_custom_call.1} parent=35 // pred_check
          %p330 = pneg %p155
        $region50: #{tpu_custom_call.1} parent=35 // pred_check_branch
          %332 = sbr.rel (%p330) target = $region52
        $region51: #{tpu_custom_call.1} parent=35 // pred_region
          %333 = dma.done %s326, 256
        $region52: #{tpu_custom_call.1} parent=35 // pred_fallthru
          _
        %s334 = sand.u32 %s56, 1
        %s335 = scalar_lea.sflag [#allocation6], %s334
        %s336 = sand.u32 %s56, 1
        %s337 = smul.addr %s336, 8
        %s338 = scalar_lea.vmem [#allocation5], %s337
        %p339 = pneg %p69
        %p340 = pneg %p66
        %s341 = sand.u32 %s27, 1
        %s342 = scalar_lea.sflag [#allocation9], %s341
        %s343 = sand.u32 %s84, 1
        %s344 = smul.addr %s343, 8
        %s345 = scalar_lea.vmem [#allocation8], %s344
        %p346 = pneg %p97
        %p347 = pneg %p94
        %s348 = sand.u32 %s27, 1
        %s349 = scalar_lea.sflag [#allocation9], %s348
        %s350 = sand.u32 %s112, 1
        %s351 = smul.addr %s350, 8
        %s352 = scalar_lea.vmem [#allocation10], %s351
        %p353 = pneg %p125
        %p354 = pneg %p122
        %s355 = sand.u32 %s142, 1
        %s356 = scalar_lea.sflag [#allocation12], %s355
        %s357 = sand.u32 %s142, 1
        %s358 = smul.addr %s357, 16
        %s359 = scalar_lea.vmem [#allocation11], %s358
        %p360 = pneg %p155
        %p361 = pneg %p152
        %p362 = pneg %p183
        %p363 = pneg %p180
        %s364 = sand.u32 %s170, 1
        %s365 = scalar_lea.sflag [#allocation7], %s364
        %s366 = sand.u32 %s170, 1
        %s367 = smul.addr %s366, 16
        %s368 = scalar_lea.vmem [#allocation13], %s367
        %s369 = smul.u32 2, %s32
        %s370 = smul.u32 2, %s32
        %s371 = smul.u32 2, %s32
        %s372 = smul.u32 2, %s32
        %s373 = smul.u32 2, %s32
        %p375 = scmp.eq.s32.totalorder %s34, 0
        // Predicated region
        $region53: #{tpu_custom_call.1} parent=35 // pred_check
          %p376 = pneg %p375
        $region54: #{tpu_custom_call.1} parent=35 // pred_check_branch
          %378 = sbr.rel (%p376) target = $region56
        $region55: #{tpu_custom_call.1} parent=35 // pred_region
          %vm379 = vcmask 7168
          %380 = vst.msk [vmem:[#allocation2] sm:$0xff] %vm379, -inf
          %381 = vst.msk [vmem:[#allocation2 + $0x8] sm:$0xff] %vm379, -inf
          %382 = vst.msk [vmem:[#allocation3] sm:$0xff] %vm379, 0.0
          %383 = vst.msk [vmem:[#allocation3 + $0x8] sm:$0xff] %vm379, 0.0
          %vm384 = vcmask 261120
          %385 = vst.msk [vmem:[#allocation4] sm:$0xff] %vm384, 0.0
          %386 = vst.msk [vmem:[#allocation4 + $0x8] sm:$0xff] %vm384, 0.0
        $region56: #{tpu_custom_call.1} parent=35 // pred_fallthru
          _
        %v387 = vld [vmem:[%s302] sm:$0xf]
        %v388 = vld [vmem:[%s302 + $0x4] sm:$0xf]
        %v389 = vld [vmem:[%s311] sm:$0xf]
        %v390 = vld [vmem:[%s311 + $0x4] sm:$0xf]
        %vm391 = vcmask 261120
        %v393 = vsel %vm391, %v387, 0
        %v396 = vsel %vm391, %v389, 0
        %398 = vmatprep.subr.bf16.mxu0 0
        %399 = vmatpush1.bf16.xpose.msra.mxu0 0
        %400 = vmatprep.subr.bf16.mxu0 0
        %401 = vmatpush1.bf16.xpose.msra.mxu0 0
        %402 = vmatprep.subr.bf16.mxu0 0
        %403 = vmatpush1.bf16.xpose.msra.mxu0 0
        %404 = vmatprep.subr.bf16.mxu0 0
        %405 = vmatpush1.bf16.xpose.msra.mxu0 0
        %406 = vmatprep.subr.bf16.mxu0 0
        %407 = vmatpush1.bf16.xpose.msra.mxu0 0
        %408 = vmatprep.subr.bf16.mxu0 0
        %409 = vmatpush1.bf16.xpose.msra.mxu0 0
        %410 = vmatprep.subr.bf16.mxu0 0
        %411 = vmatpush1.bf16.xpose.msra.mxu0 0
        %412 = vmatprep.subr.bf16.mxu0 0
        %413 = vmatpush1.bf16.xpose.msra.mxu0 %v396
        %414 = vmatprep.subr.bf16.mxu0 0
        %415 = vmatpush2.bf16.xpose.msra.mxu0 0
        %416 = vmatprep.subr.bf16.mxu0 0
        %417 = vmatpush2.bf16.xpose.msra.mxu0 0
        %418 = vmatprep.subr.bf16.mxu0 0
        %419 = vmatpush2.bf16.xpose.msra.mxu0 0
        %420 = vmatprep.subr.bf16.mxu0 0
        %421 = vmatpush2.bf16.xpose.msra.mxu0 0
        %422 = vmatprep.subr.bf16.mxu0 0
        %423 = vmatpush2.bf16.xpose.msra.mxu0 0
        %424 = vmatprep.subr.bf16.mxu0 0
        %425 = vmatpush2.bf16.xpose.msra.mxu0 0
        %426 = vmatprep.subr.bf16.mxu0 0
        %427 = vmatpush2.bf16.xpose.msra.mxu0 0
        %428 = vmatprep.subr.bf16.mxu0 0
        %429 = vmatpush2.bf16.xpose.msra.mxu0 0
        %430 = vmatprep.mubr.bf16.mxu0 0
        %431 = vmatmul.mubr.bf16.gmra.mxu0 %v393
        %v432 = vpop.f32.mrf.mxu0
        %v433 = vadd.f32 0.0, %v432
        %v434 = vpop.f32.mrf.mxu0
        %v435 = vpop.f32.mrf.mxu0
        %v436 = vpop.f32.mrf.mxu0
        %437 = vdwg.mxu0
        %v439 = vsel %vm391, %v388, 0
        %v442 = vsel %vm391, %v390, 0
        %444 = vmatprep.subr.bf16.mxu0 0
        %445 = vmatpush1.bf16.xpose.msra.mxu0 0
        %446 = vmatprep.subr.bf16.mxu0 0
        %447 = vmatpush1.bf16.xpose.msra.mxu0 0
        %448 = vmatprep.subr.bf16.mxu0 0
        %449 = vmatpush1.bf16.xpose.msra.mxu0 0
        %450 = vmatprep.subr.bf16.mxu0 0
        %451 = vmatpush1.bf16.xpose.msra.mxu0 0
        %452 = vmatprep.subr.bf16.mxu0 0
        %453 = vmatpush1.bf16.xpose.msra.mxu0 0
        %454 = vmatprep.subr.bf16.mxu0 0
        %455 = vmatpush1.bf16.xpose.msra.mxu0 0
        %456 = vmatprep.subr.bf16.mxu0 0
        %457 = vmatpush1.bf16.xpose.msra.mxu0 0
        %458 = vmatprep.subr.bf16.mxu0 0
        %459 = vmatpush1.bf16.xpose.msra.mxu0 %v442
        %460 = vmatprep.subr.bf16.mxu0 0
        %461 = vmatpush2.bf16.xpose.msra.mxu0 0
        %462 = vmatprep.subr.bf16.mxu0 0
        %463 = vmatpush2.bf16.xpose.msra.mxu0 0
        %464 = vmatprep.subr.bf16.mxu0 0
        %465 = vmatpush2.bf16.xpose.msra.mxu0 0
        %466 = vmatprep.subr.bf16.mxu0 0
        %467 = vmatpush2.bf16.xpose.msra.mxu0 0
        %468 = vmatprep.subr.bf16.mxu0 0
        %469 = vmatpush2.bf16.xpose.msra.mxu0 0
        %470 = vmatprep.subr.bf16.mxu0 0
        %471 = vmatpush2.bf16.xpose.msra.mxu0 0
        %472 = vmatprep.subr.bf16.mxu0 0
        %473 = vmatpush2.bf16.xpose.msra.mxu0 0
        %474 = vmatprep.subr.bf16.mxu0 0
        %475 = vmatpush2.bf16.xpose.msra.mxu0 0
        %476 = vmatprep.mubr.bf16.mxu0 0
        %477 = vmatmul.mubr.bf16.gmra.mxu0 %v439
        %v478 = vpop.f32.mrf.mxu0
        %v479 = vadd.f32 0.0, %v478
        %v480 = vpop.f32.mrf.mxu0
        %v481 = vpop.f32.mrf.mxu0
        %v482 = vpop.f32.mrf.mxu0
        %483 = vdwg.mxu0
        %v484 = vld [vmem:[%s329] sm:$0xff]
        %v485 = vld [vmem:[%s329 + $0x8] sm:$0xff]
        %vm486 = vcmp.eq.f32.partialorder %v484, 0.0
        %vm487 = vcmp.eq.f32.partialorder %v485, 0.0
        %v488 = vsel %vm486, -3.4028235e+38, %v433
        %v489 = vsel %vm487, -3.4028235e+38, %v479
        %v490 = vld [vmem:[#allocation2] sm:$0xff]
        %v491 = vld [vmem:[#allocation2 + $0x8] sm:$0xff]
        %vm492 = vcmask 64512
        %v493 = vsel %vm492, %v488, -inf
        %494 = vmax.xlane.f32.xlu0 %v493
        %v495 = vpop.xlane.xlu0 %494
        %v496 = vsel %vm492, %v489, -inf
        %497 = vmax.xlane.f32.xlu0 %v496
        %v498 = vpop.xlane.xlu0 %497
        %v499 = vmax.f32 %v490, %v495
        %v500 = vmax.f32 %v491, %v498
        %v501 = vsub.f32 %v490, %v499
        %v502 = vsub.f32 %v491, %v500
        %v503 = vmul.f32 %v501, 1.442695
        %v504 = vpow.pop %v503
        %v505 = vmul.f32 %v502, 1.442695
        %v506 = vpow.pop %v505
        %508 = vset.pattern.permute.xlu0 0
        %509 = vperm.xlu0 %508, %v499
        %v510 = vpop.permute.xlu0 %509
        %513 = vset.pattern.permute.xlu0 0
        %514 = vperm.xlu0 %513, %v500
        %v515 = vpop.permute.xlu0 %514
        %v517 = vsub.f32 %v488, %v510
        %v518 = vsub.f32 %v489, %v515
        %v519 = vmul.f32 %v517, 1.442695
        %v520 = vpow.pop %v519
        %v521 = vmul.f32 %v518, 1.442695
        %v522 = vpow.pop %v521
        %v523 = vld [vmem:[#allocation3] sm:$0xff]
        %v524 = vld [vmem:[#allocation3 + $0x8] sm:$0xff]
        %v525 = vmul.f32 %v504, %v523
        %v526 = vmul.f32 %v506, %v524
        %v527 = vsel %vm492, %v520, 0.0
        %528 = vadd.xlane.f32.xlu0 %v527
        %v529 = vpop.xlane.xlu0 %528
        %v530 = vsel %vm492, %v522, 0.0
        %531 = vadd.xlane.f32.xlu0 %v530
        %v532 = vpop.xlane.xlu0 %531
        %v533 = vadd.f32 %v525, %v529
        %v534 = vadd.f32 %v526, %v532
        %vm535 = vcmask 7168
        %536 = vst.msk [vmem:[#allocation3] sm:$0xff] %vm535, %v533
        %537 = vst.msk [vmem:[#allocation3 + $0x8] sm:$0xff] %vm535, %v534
        %v538 = vld [vmem:[#allocation4] sm:$0xff]
        %v539 = vld [vmem:[#allocation4 + $0x8] sm:$0xff]
        %541 = vset.pattern.permute.xlu0 0
        %542 = vperm.xlu0 %541, %v504
        %v543 = vpop.permute.xlu0 %542
        %546 = vset.pattern.permute.xlu0 0
        %547 = vperm.xlu0 %546, %v506
        %v548 = vpop.permute.xlu0 %547
        %v550 = vmul.f32 %v543, %v538
        %v551 = vmul.f32 %v548, %v539
        %v552 = vpack.c.bf16 %v520, %v520
        %v553 = vpack.c.bf16 %v522, %v522
        %v554 = vld [vmem:[%s320] sm:$0xf]
        %v555 = vld [vmem:[%s320 + $0x4] sm:$0xf]
        %v557 = vsel %vm492, %v552, 0
        %vm559 = vcmask 1043456
        %v561 = vsel %vm559, %v554, 0
        %563 = vmatprep.subr.bf16.mxu0 0
        %564 = vmatpush1.bf16.msra.mxu0 0
        %565 = vmatprep.subr.bf16.mxu0 0
        %566 = vmatpush1.bf16.msra.mxu0 0
        %567 = vmatprep.subr.bf16.mxu0 0
        %568 = vmatpush1.bf16.msra.mxu0 0
        %569 = vmatprep.subr.bf16.mxu0 0
        %570 = vmatpush1.bf16.msra.mxu0 0
        %571 = vmatprep.subr.bf16.mxu0 0
        %572 = vmatpush1.bf16.msra.mxu0 0
        %573 = vmatprep.subr.bf16.mxu0 0
        %574 = vmatpush1.bf16.msra.mxu0 0
        %575 = vmatprep.subr.bf16.mxu0 0
        %576 = vmatpush1.bf16.msra.mxu0 0
        %577 = vmatprep.subr.bf16.mxu0 0
        %578 = vmatpush1.bf16.msra.mxu0 %v561
        %579 = vmatprep.subr.bf16.mxu0 0
        %580 = vmatpush2.bf16.msra.mxu0 0
        %581 = vmatprep.subr.bf16.mxu0 0
        %582 = vmatpush2.bf16.msra.mxu0 0
        %583 = vmatprep.subr.bf16.mxu0 0
        %584 = vmatpush2.bf16.msra.mxu0 0
        %585 = vmatprep.subr.bf16.mxu0 0
        %586 = vmatpush2.bf16.msra.mxu0 0
        %587 = vmatprep.subr.bf16.mxu0 0
        %588 = vmatpush2.bf16.msra.mxu0 0
        %589 = vmatprep.subr.bf16.mxu0 0
        %590 = vmatpush2.bf16.msra.mxu0 0
        %591 = vmatprep.subr.bf16.mxu0 0
        %592 = vmatpush2.bf16.msra.mxu0 0
        %593 = vmatprep.subr.bf16.mxu0 0
        %594 = vmatpush2.bf16.msra.mxu0 0
        %595 = vmatprep.mubr.bf16.mxu0 0
        %596 = vmatmul.mubr.bf16.gmra.mxu0 %v557
        %v597 = vpop.f32.mrf.mxu0
        %v598 = vadd.f32 0.0, %v597
        %v599 = vpop.f32.mrf.mxu0
        %v600 = vpop.f32.mrf.mxu0
        %v601 = vpop.f32.mrf.mxu0
        %602 = vdwg.mxu0
        %v604 = vsel %vm492, %v553, 0
        %v607 = vsel %vm559, %v555, 0
        %609 = vmatprep.subr.bf16.mxu0 0
        %610 = vmatpush1.bf16.msra.mxu0 0
        %611 = vmatprep.subr.bf16.mxu0 0
        %612 = vmatpush1.bf16.msra.mxu0 0
        %613 = vmatprep.subr.bf16.mxu0 0
        %614 = vmatpush1.bf16.msra.mxu0 0
        %615 = vmatprep.subr.bf16.mxu0 0
        %616 = vmatpush1.bf16.msra.mxu0 0
        %617 = vmatprep.subr.bf16.mxu0 0
        %618 = vmatpush1.bf16.msra.mxu0 0
        %619 = vmatprep.subr.bf16.mxu0 0
        %620 = vmatpush1.bf16.msra.mxu0 0
        %621 = vmatprep.subr.bf16.mxu0 0
        %622 = vmatpush1.bf16.msra.mxu0 0
        %623 = vmatprep.subr.bf16.mxu0 0
        %624 = vmatpush1.bf16.msra.mxu0 %v607
        %625 = vmatprep.subr.bf16.mxu0 0
        %626 = vmatpush2.bf16.msra.mxu0 0
        %627 = vmatprep.subr.bf16.mxu0 0
        %628 = vmatpush2.bf16.msra.mxu0 0
        %629 = vmatprep.subr.bf16.mxu0 0
        %630 = vmatpush2.bf16.msra.mxu0 0
        %631 = vmatprep.subr.bf16.mxu0 0
        %632 = vmatpush2.bf16.msra.mxu0 0
        %633 = vmatprep.subr.bf16.mxu0 0
        %634 = vmatpush2.bf16.msra.mxu0 0
        %635 = vmatprep.subr.bf16.mxu0 0
        %636 = vmatpush2.bf16.msra.mxu0 0
        %637 = vmatprep.subr.bf16.mxu0 0
        %638 = vmatpush2.bf16.msra.mxu0 0
        %639 = vmatprep.subr.bf16.mxu0 0
        %640 = vmatpush2.bf16.msra.mxu0 0
        %641 = vmatprep.mubr.bf16.mxu0 0
        %642 = vmatmul.mubr.bf16.gmra.mxu0 %v604
        %v643 = vpop.f32.mrf.mxu0
        %v644 = vadd.f32 0.0, %v643
        %v645 = vpop.f32.mrf.mxu0
        %v646 = vpop.f32.mrf.mxu0
        %v647 = vpop.f32.mrf.mxu0
        %648 = vdwg.mxu0
        %v649 = vadd.f32 %v550, %v598
        %v650 = vadd.f32 %v551, %v644
        %651 = vst.msk [vmem:[#allocation4] sm:$0xff] %vm391, %v649
        %652 = vst.msk [vmem:[#allocation4 + $0x8] sm:$0xff] %vm391, %v650
        %653 = vst.msk [vmem:[#allocation2] sm:$0xff] %vm535, %v499
        %654 = vst.msk [vmem:[#allocation2 + $0x8] sm:$0xff] %vm535, %v500
        // Predicated region
        $region57: #{tpu_custom_call.1} parent=35 // pred_check
          %p655 = pneg %p375
        $region58: #{tpu_custom_call.1} parent=35 // pred_check_branch
          %657 = sbr.rel (%p655) target = $region60
        $region59: #{tpu_custom_call.1} parent=35 // pred_region
          %v658 = vld [vmem:[#allocation3] sm:$0xff]
          %v659 = vld [vmem:[#allocation3 + $0x8] sm:$0xff]
          %v660 = vrcp.pop %v658
          %v661 = vrcp.pop %v659
          %v662 = vld [vmem:[#allocation4] sm:$0xff]
          %v663 = vld [vmem:[#allocation4 + $0x8] sm:$0xff]
          %665 = vset.pattern.permute.xlu0 0
          %666 = vperm.xlu0 %665, %v660
          %v667 = vpop.permute.xlu0 %666
          %670 = vset.pattern.permute.xlu0 0
          %671 = vperm.xlu0 %670, %v661
          %v672 = vpop.permute.xlu0 %671
          %v674 = vmul.f32 %v662, %v667
          %v675 = vmul.f32 %v663, %v672
          %676 = vst.msk [vmem:[%s368] sm:$0xff] %vm391, %v674
          %677 = vst.msk [vmem:[%s368 + $0x8] sm:$0xff] %vm391, %v675
        $region60: #{tpu_custom_call.1} parent=35 // pred_fallthru
          _
        %s678 = sand.u32 %s170, 1
        %s679 = scalar_lea.sflag [#allocation7], %s678
        %s680 = sand.u32 %s170, 1
        %s681 = smul.addr %s680, 16
        %s682 = scalar_lea.vmem [#allocation13], %s681
        // Predicated region
        $region61: #{tpu_custom_call.1} parent=35 // pred_check
          %p683 = pneg %p180
        $region62: #{tpu_custom_call.1} parent=35 // pred_check_branch
          %685 = sbr.rel (%p683) target = $region64
        $region63: #{tpu_custom_call.1} parent=35 // pred_region
          %s686 = smul.u32 2, %s32
          %s688 = ssub.s32 256, 256
          %689 = vsyncadd %s679, %s688
          %s690 = sadd.s32 %s33, %s686
          %s691 = smul.addr %s690, 128
          %s692 = scalar_lea.hbm %s4, %s691
          %s693 = sshll.u32 %s682, 4
          %s694 = int_to_ptr.vmem [resolvable:$true] %s693
          %699 = dma.vmem_to_hbm [thread:$0]  %s694, 256, %s692, %s679, 128, 128, 8
        $region64: #{tpu_custom_call.1} parent=35 // pred_fallthru
          _
      $region36: #{tpu_custom_call.1} parent=5 // pred_fallthru
        _
      %p700 = scmp.le.s32.totalorder 2, %s22
      // Predicated region
      $region65: #{tpu_custom_call.1} parent=5 // pred_check
        %p701 = pneg %p700
      $region66: #{tpu_custom_call.1} parent=5 // pred_check_branch
        %703 = sbr.rel (%p701) target = $region68
      $region67: #{tpu_custom_call.1} parent=5 // pred_region
        %s704 = ssub.s32 %s22, 2
        // Predicated region
        $region69: #{tpu_custom_call.1} parent=67 // pred_check
          %p705 = pneg %p186
        $region70: #{tpu_custom_call.1} parent=67 // pred_check_branch
          %707 = sbr.rel (%p705) target = $region72
        $region71: #{tpu_custom_call.1} parent=67 // pred_region
          %s708 = sand.u32 %s171, 1
          %s709 = scalar_lea.sflag [#allocation7], %s708
          %s710 = sand.u32 %s171, 1
          %s711 = smul.addr %s710, 16
          %s712 = scalar_lea.vmem [#allocation13], %s711
          %713 = dma.done %s709, 256
        $region72: #{tpu_custom_call.1} parent=67 // pred_fallthru
          _
      $region68: #{tpu_custom_call.1} parent=5 // pred_fallthru
        _
    $region6: #{tpu_custom_call.1} parent=1 // loop_footer
      %s26 = sadd.s32 1, %s22
    $region7: #{tpu_custom_call.1} parent=1 // loop_footer_branch
      %21 = sbr.rel target = $region3
    $region8: #{tpu_custom_call.1} parent=1 // loop_exit
      _
    %714 = vsyncpa [#allocation6], 1
    %s715 = scalar_lea.sflag [#allocation6], 1
    %716 = vsyncpa %s715, 1
    %717 = vsyncpa [#allocation9], 1
    %s718 = scalar_lea.sflag [#allocation9], 1
    %719 = vsyncpa %s718, 1
    %720 = vsyncpa [#allocation12], 1
    %s721 = scalar_lea.sflag [#allocation12], 1
    %722 = vsyncpa %s721, 1
    %723 = vsyncpa [#allocation7], 1
    %s724 = scalar_lea.sflag [#allocation7], 1
    %725 = vsyncpa %s724, 1

</llo_original>
